<compile_context>
chip_gen: v7x
topology: tpu7x:2x2x1
jax: 0.10.0
libtpu: 0.0.40
codegen_flags: <defaults>
</compile_context>

<pallas_src>
import functools

import jax
import jax.numpy as jnp
from jax.experimental import pallas as pl
from jax.experimental.pallas import tpu as pltpu


def _round_up(x, m):
    return ((x + m - 1) // m) * m


def _time_reduction_kernel(xr_ref, keep_ref, wdw_ref, wpw_ref, bias_ref, o_ref, xp_ref,
                           *, kernel_size, stride, padding, bb, th_in,
                           n_copy, t_store, seg_rows, d_model):
    # xr_ref:   (Bb, th_in, stride*D)  bf16 pair-packed input (frame s*j+r at lanes [r*D,(r+1)*D))
    # keep_ref: (Bb, th_in, stride)    f32 1.0 = valid frame, 0.0 = padded frame
    # wdw_ref:  (K, D)                 f32 depthwise weights (w[k, c] == torch w[c, 0, k])
    # wpw_ref:  (D, Dout_p)            bf16 pointwise weights (zero-padded to lane-dense Dout)
    # bias_ref: (1, Dout_p)            f32 fused bias = bpw + bdw @ wpw
    # o_ref:    (Bb, t_store, Dout_p)  f32
    # xp_ref:   (Bb*seg_rows, stride*D) f32 staging buffer (stride-phase-major conv input)
    D = d_model
    halo = (kernel_size - 1) // stride
    needed_end = halo + n_copy          # staging rows actually read per batch segment

    # TODO(synk): convert the static b-loops to lax.fori_loop(+pl.ds) if Bb ever
    # grows past the cap (~8); small Bb keeps static unrolling & vreg pressure cheap.
    for b in range(bb):
        base = b * seg_rows

        # 1+2) Scatter the pair-packed input into the stride-phase-major staging
        #      buffer, fusing the pad-mask (0/1 multiply) on the way in.  Only the
        #      conv-padding rows NOT overwritten by the scatter are zeroed.
        for r in range(stride):
            r_src = (r - padding) % stride
            off = (r_src + padding - r) // stride
            lane0, lane1 = r * D, (r + 1) * D
            if off > 0:                               # left conv padding rows
                xp_ref[base:base + off, lane0:lane1] = jnp.zeros((off, D), xp_ref.dtype)
            top = off + th_in
            if top < needed_end:                      # right conv padding rows (read later)
                xp_ref[base + top:base + needed_end, lane0:lane1] = jnp.zeros(
                    (needed_end - top, D), xp_ref.dtype)
            x_blk = xr_ref[b, :, r_src * D:(r_src + 1) * D].astype(jnp.float32)  # (th_in, D)
            k_blk = keep_ref[b, :, r_src:r_src + 1]                              # (th_in, 1) 0/1
            xp_ref[base + off:base + off + th_in, lane0:lane1] = x_blk * k_blk

        # 3) Depthwise conv: every tap is a contiguous shifted slice of the staging
        #    buffer; accumulate in f32 vregs.
        acc = None
        for k in range(kernel_size):
            row0 = base + k // stride
            lane0 = (k % stride) * D
            tap = xp_ref[row0:row0 + n_copy, lane0:lane0 + D] * wdw_ref[k:k + 1, :]
            acc = tap if acc is None else acc + tap

        # 4+5) Pointwise 1x1 conv (bf16 operands, f32 MXU accumulation) fused with
        #      the output write: only the n_copy valid rows hit the MXU, no VMEM temp.
        out_b = jnp.dot(acc.astype(jnp.bfloat16), wpw_ref[...],
                        preferred_element_type=jnp.float32) + bias_ref[...]
        o_ref[b, 0:n_copy, :] = out_b.astype(o_ref.dtype)
        if t_store > n_copy:   # torch F.pad tail (L > T_out): zero-fill
            o_ref[b, n_copy:t_store, :] = jnp.zeros(
                (t_store - n_copy, o_ref.shape[-1]), o_ref.dtype)


def _vmem_limit_bytes():
    """Generation-aware scoped-VMEM limit (v7x: 48 MiB, v5e/v6e: 64 MiB)."""
    try:
        cap = int(getattr(pltpu.get_tpu_info(), "vmem_capacity_bytes", 128 << 20))
    except Exception:
        cap = 128 << 20
    return int(min(64 << 20, (cap * 3) // 4))


def _estimate_vmem(bb, th_in, stride, D, Dout_p, seg_rows, t_store, n_copy, kernel_size):
    halo = (kernel_size - 1) // stride
    return (2 * bb * th_in * stride * D * 2            # bf16 input block, double-buffered
            + 2 * bb * th_in * stride * 4              # f32 keep block, double-buffered
            + bb * seg_rows * stride * D * 4           # f32 staging scratch
            + (halo + n_copy) * D * 4                  # live tap slices
            + n_copy * (D * 4 + Dout_p * 4)            # accumulator + matmul result
            + 2 * bb * t_store * Dout_p * 4            # f32 output block, double-buffered
            + kernel_size * D * 4 + D * Dout_p * 2 + Dout_p * 4)   # weights


def _pick_batch_block(B, th_in, stride, D, Dout_p, seg_rows, t_store, n_copy,
                      kernel_size, budget_bytes, max_bb=8):
    # Keep grid >= 2 whenever possible so both v7x TensorCores get work
    # (harmless on single-TC v5e/v6e since per-segment work scales with Bb anyway).
    cap = max(1, min(max_bb, B // 2 if B >= 2 else 1))
    best = None
    for bb in range(1, cap + 1):
        if B % bb:
            continue
        if _estimate_vmem(bb, th_in, stride, D, Dout_p, seg_rows, t_store, n_copy,
                          kernel_size) <= budget_bytes:
            best = bb
    if best is None:
        # TODO(synk): add a halo'd time-tiling grid axis so even Bb=1 fits v7x's
        #             64 MiB VMEM for very long sequences.
        raise ValueError("TimeReduction block does not fit the VMEM budget; "
                         "time tiling is not implemented yet.")
    return best


def time_reduction_forward(x, params, att_mask=None, pad_mask=None,
                           *, kernel_size=5, stride=2):
    """Matches TimeReductionModule.forward(x, att_mask, pad_mask)."""
    wdw, bdw, wpw, bpw = params
    B, T, D = x.shape
    Dout = wpw.shape[1]
    padding = max(0, kernel_size - stride)
    T_out = (T + 2 * padding - kernel_size) // stride + 1

    # bf16 HBM operand path (halves input DMA traffic); accumulation stays f32 in-kernel.
    x = x.astype(jnp.bfloat16)

    # Keep-mask (1.0 = valid); masking of x itself is fused into the kernel.
    if pad_mask is not None:
        keep = jnp.where(pad_mask, 0.0, 1.0).astype(jnp.float32)
    else:
        keep = jnp.ones((B, T), jnp.float32)

    # View x as pair-packed (B, T/stride, stride*D) -- a free reshape.
    Tc = _round_up(T, stride)
    if Tc != T:
        # TODO(synk): fuse this tail pad into the kernel to avoid the one-off copy.
        x = jnp.pad(x, ((0, 0), (0, Tc - T), (0, 0)))
        keep = jnp.pad(keep, ((0, 0), (0, Tc - T)))
    th_in = Tc // stride
    x_r = x.reshape(B, th_in, stride * D)
    keep_r = keep.reshape(B, th_in, stride)

    # Fold the depthwise bias into the pointwise bias (1x1 conv is linear).
    wdw = wdw.astype(jnp.float32)
    wpw_f = wpw.astype(jnp.float32)
    bias_f = (bpw.reshape(1, Dout).astype(jnp.float32)
              + bdw.reshape(1, D).astype(jnp.float32) @ wpw_f)

    # Lane-dense output: pad Dout up to a multiple of 128; pointwise weights in bf16.
    Dout_p = max(128, _round_up(Dout, 128))
    if Dout_p != Dout:
        wpw_p = jnp.pad(wpw_f, ((0, 0), (0, Dout_p - Dout)))
        bias_p = jnp.pad(bias_f, ((0, 0), (0, Dout_p - Dout)))
    else:
        wpw_p, bias_p = wpw_f, bias_f
    wpw_p = wpw_p.astype(jnp.bfloat16)

    # Final stored time length (fuses torch's F.pad / truncate into the kernel).
    if att_mask is not None and pad_mask is not None:
        # TODO(synk): derive att_out from lengths to skip this O(B*T^2) strided copy.
        att_out = att_mask[:, ::stride, ::stride]
        pad_out = pad_mask[:, ::stride]
        T_store = pad_out.shape[-1]
    else:
        att_out, pad_out = att_mask, pad_mask
        T_store = T_out

    n_copy = min(T_out, T_store)

    # Staging-buffer geometry.
    halo = (kernel_size - 1) // stride
    max_off = 0
    for r in range(stride):
        r_src = (r - padding) % stride
        max_off = max(max_off, (r_src + padding - r) // stride)
    seg_rows = _round_up(max(T_out + halo, max_off + th_in), 8)

    vmem_limit = _vmem_limit_bytes()
    Bb = _pick_batch_block(B, th_in, stride, D, Dout_p, seg_rows, T_store, n_copy,
                           kernel_size, budget_bytes=int(vmem_limit * 0.8))
    m_alloc = Bb * seg_rows

    kern = functools.partial(
        _time_reduction_kernel,
        kernel_size=kernel_size, stride=stride, padding=padding, bb=Bb,
        th_in=th_in, n_copy=n_copy, t_store=T_store, seg_rows=seg_rows, d_model=D)

    flops = 2 * B * n_copy * D * (Dout_p + kernel_size)
    bytes_accessed = (B * th_in * stride * D * 2 + B * th_in * stride * 4
                      + B * T_store * Dout_p * 4
                      + kernel_size * D * 4 + D * Dout_p * 2 + Dout_p * 4)

    y = pl.pallas_call(
        kern,
        out_shape=jax.ShapeDtypeStruct((B, T_store, Dout_p), jnp.float32),
        grid=(B // Bb,),
        in_specs=[
            pl.BlockSpec((Bb, th_in, stride * D), lambda i: (i, 0, 0)),
            pl.BlockSpec((Bb, th_in, stride), lambda i: (i, 0, 0)),
            pl.BlockSpec((kernel_size, D), lambda i: (0, 0)),
            pl.BlockSpec((D, Dout_p), lambda i: (0, 0)),
            pl.BlockSpec((1, Dout_p), lambda i: (0, 0)),
        ],
        out_specs=pl.BlockSpec((Bb, T_store, Dout_p), lambda i: (i, 0, 0)),
        scratch_shapes=[pltpu.VMEM((m_alloc, stride * D), jnp.float32)],
        compiler_params=pltpu.CompilerParams(
            dimension_semantics=("parallel",),
            vmem_limit_bytes=vmem_limit),
        cost_estimate=pl.CostEstimate(flops=int(flops), transcendentals=0,
                                      bytes_accessed=int(bytes_accessed)),
    )(x_r, keep_r, wdw, wpw_p, bias_p)

    if Dout_p != Dout:
        # TODO(synk): let the consumer fuse this slice (extra HBM pass) or mask-store Dout lanes.
        y = y[:, :, :Dout]
    return y, att_out, pad_out


def init_params(key, d_model, out_dim, kernel_size):
    """Deterministic init matching reset_parameters() ranges."""
    k1, k2, k3, k4 = jax.random.split(key, 4)
    dw_max = kernel_size ** (-0.5)
    pw_max = d_model ** (-0.5)
    wdw = jax.random.uniform(k1, (kernel_size, d_model), jnp.float32, -dw_max, dw_max)
    bdw = jax.random.uniform(k2, (1, d_model), jnp.float32, -dw_max, dw_max)
    wpw = jax.random.uniform(k3, (d_model, out_dim), jnp.float32, -pw_max, pw_max)
    bpw = jax.random.uniform(k4, (1, out_dim), jnp.float32, -pw_max, pw_max)
    return wdw, bdw, wpw, bpw


def _ref_forward(x, params, att_mask, pad_mask, kernel_size, stride):
    """Pure-JAX f32 reference of the same semantics (for the correctness check)."""
    wdw, bdw, wpw, bpw = params
    x = jnp.where(pad_mask[:, :, None], 0.0, x.astype(jnp.float32))
    padding = max(0, kernel_size - stride)
    xp = jnp.pad(x, ((0, 0), (padding, padding), (0, 0)))
    T_pad = xp.shape[1]
    T_out = (T_pad - kernel_size) // stride + 1
    y = jnp.zeros((x.shape[0], T_out, x.shape[2]), jnp.float32)
    for k in range(kernel_size):
        y = y + xp[:, k:k + (T_out - 1) * stride + 1:stride, :] * wdw[k]
    y = y + bdw
    out = jnp.einsum('btd,de->bte', y, wpw,
                     precision=jax.lax.Precision.HIGHEST) + bpw
    att_mask = att_mask[:, ::stride, ::stride]
    pad_mask = pad_mask[:, ::stride]
    L = pad_mask.shape[-1]
    if L > T_out:
        out = jnp.pad(out, ((0, 0), (0, L - T_out), (0, 0)))
    elif L < T_out:
        out = out[:, :L, :]
    return out, att_mask, pad_mask


if __name__ == "__main__":
    B, T, D_MODEL, OUT_DIM = 2, 16, 128, 128
    KERNEL_SIZE, STRIDE = 5, 2

    key = jax.random.PRNGKey(0)
    kx, kp = jax.random.split(key, 2)
    x = jax.random.normal(kx, (B, T, D_MODEL), jnp.float32)
    # pad_mask: True where padded (last few frames of the second sequence)
    lengths = jnp.array([T, T - 3])
    pad_mask = jnp.arange(T)[None, :] >= lengths[:, None]          # (B, T) bool
    att_mask = (~pad_mask)[:, :, None] & (~pad_mask)[:, None, :]   # (B, T, T) bool

    params = init_params(kp, D_MODEL, OUT_DIM, KERNEL_SIZE)

    out, att_out, pad_out = time_reduction_forward(
        x, params, att_mask=att_mask, pad_mask=pad_mask,
        kernel_size=KERNEL_SIZE, stride=STRIDE)
    out = jax.block_until_ready(out)

    # Reference sees the bf16-rounded input (the kernel's intended HBM format), so the
    # tolerance below covers only the kernel math (bf16 MXU operands, f32 accumulation).
    x_q = x.astype(jnp.bfloat16).astype(jnp.float32)
    ref_out, ref_att, ref_pad = _ref_forward(
        x_q, params, att_mask, pad_mask, KERNEL_SIZE, STRIDE)
    assert out.shape == ref_out.shape, (out.shape, ref_out.shape)
    err = float(jnp.max(jnp.abs(out - ref_out)))
    assert jnp.allclose(out, ref_out, atol=2e-2, rtol=2e-2), err
    assert jnp.array_equal(att_out, ref_att)
    assert jnp.array_equal(pad_out, ref_pad)

    print("KERNEL_OK")
</pallas_src>

<mosaic_0001>
module attributes {stable_mosaic.version = 11 : i64} {
  func.func @_time_reduction_kernel(%arg0: i32, %arg1: memref<1x8x256xbf16, #tpu.memory_space<vmem>>, %arg2: memref<1x8x2xf32, #tpu.memory_space<vmem>>, %arg3: memref<5x128xf32, #tpu.memory_space<vmem>>, %arg4: memref<128x128xbf16, #tpu.memory_space<vmem>>, %arg5: memref<1x128xf32, #tpu.memory_space<vmem>>, %arg6: memref<1x8x128xf32, #tpu.memory_space<vmem>>, %arg7: memref<16x256xf32, #tpu.memory_space<vmem>>) attributes {dimension_semantics = [#tpu.dimension_semantics<parallel>], iteration_bounds = array<i64: 2>, scalar_prefetch = 0 : i64, scratch_operands = 1 : i64, tpu.core_type = #tpu.core_type<tc>, window_params = [{transform_indices = @transform_0, window_bounds = array<i64: 1, 8, 256>}, {transform_indices = @transform_1, window_bounds = array<i64: 1, 8, 2>}, {pipeline_mode = #tpu.pipeline_mode<synchronous>, transform_indices = @transform_2, window_bounds = array<i64: 5, 128>}, {pipeline_mode = #tpu.pipeline_mode<synchronous>, transform_indices = @transform_3, window_bounds = array<i64: 128, 128>}, {pipeline_mode = #tpu.pipeline_mode<synchronous>, transform_indices = @transform_4, window_bounds = array<i64: 1, 128>}, {transform_indices = @transform_5, window_bounds = array<i64: 1, 8, 128>}]} {
    %cst = arith.constant 0.000000e+00 : f32
    %0 = vector.broadcast %cst : f32 to vector<2x128xf32>
    %c0 = arith.constant 0 : index
    %c0_0 = arith.constant 0 : index
    %1 = vector.load %arg7[%c0, %c0_0] : memref<16x256xf32, #tpu.memory_space<vmem>>, vector<2x128xf32>
    tpu.vector_store %arg7[%c0, %c0_0], %0 {strides = array<i32>} : memref<16x256xf32, #tpu.memory_space<vmem>>, vector<2x128xf32>,
    %c0_1 = arith.constant 0 : index
    %c0_2 = arith.constant 0 : index
    %c128 = arith.constant 128 : index
    %2 = vector.load %arg1[%c0_1, %c0_2, %c128] : memref<1x8x256xbf16, #tpu.memory_space<vmem>>, vector<1x8x128xbf16>
    %3 = vector.shape_cast %2 : vector<1x8x128xbf16> to vector<8x128xbf16>
    %4 = arith.extf %3 : vector<8x128xbf16> to vector<8x128xf32>
    %c0_3 = arith.constant 0 : index
    %c0_4 = arith.constant 0 : index
    %c1 = arith.constant 1 : index
    %5 = vector.load %arg2[%c0_3, %c0_4, %c1] : memref<1x8x2xf32, #tpu.memory_space<vmem>>, vector<1x8x1xf32>
    %6 = vector.shape_cast %5 : vector<1x8x1xf32> to vector<8x1xf32>
    %7 = vector.broadcast %6 : vector<8x1xf32> to vector<8x128xf32>
    %8 = arith.mulf %4, %7 : vector<8x128xf32>
    %c2 = arith.constant 2 : index
    %c0_5 = arith.constant 0 : index
    %9 = vector.load %arg7[%c2, %c0_5] : memref<16x256xf32, #tpu.memory_space<vmem>>, vector<8x128xf32>
    tpu.vector_store %arg7[%c2, %c0_5], %8 {strides = array<i32>} : memref<16x256xf32, #tpu.memory_space<vmem>>, vector<8x128xf32>,
    %cst_6 = arith.constant 0.000000e+00 : f32
    %10 = vector.broadcast %cst_6 : f32 to vector<1x128xf32>
    %c0_7 = arith.constant 0 : index
    %c128_8 = arith.constant 128 : index
    %11 = vector.load %arg7[%c0_7, %c128_8] : memref<16x256xf32, #tpu.memory_space<vmem>>, vector<1x128xf32>
    tpu.vector_store %arg7[%c0_7, %c128_8], %10 {strides = array<i32>} : memref<16x256xf32, #tpu.memory_space<vmem>>, vector<1x128xf32>,
    %cst_9 = arith.constant 0.000000e+00 : f32
    %12 = vector.broadcast %cst_9 : f32 to vector<1x128xf32>
    %c9 = arith.constant 9 : index
    %c128_10 = arith.constant 128 : index
    %13 = vector.load %arg7[%c9, %c128_10] : memref<16x256xf32, #tpu.memory_space<vmem>>, vector<1x128xf32>
    tpu.vector_store %arg7[%c9, %c128_10], %12 {strides = array<i32>} : memref<16x256xf32, #tpu.memory_space<vmem>>, vector<1x128xf32>,
    %c0_11 = arith.constant 0 : index
    %c0_12 = arith.constant 0 : index
    %c0_13 = arith.constant 0 : index
    %14 = vector.load %arg1[%c0_11, %c0_12, %c0_13] : memref<1x8x256xbf16, #tpu.memory_space<vmem>>, vector<1x8x128xbf16>
    %15 = vector.shape_cast %14 : vector<1x8x128xbf16> to vector<8x128xbf16>
    %16 = arith.extf %15 : vector<8x128xbf16> to vector<8x128xf32>
    %c0_14 = arith.constant 0 : index
    %c0_15 = arith.constant 0 : index
    %c0_16 = arith.constant 0 : index
    %17 = vector.load %arg2[%c0_14, %c0_15, %c0_16] : memref<1x8x2xf32, #tpu.memory_space<vmem>>, vector<1x8x1xf32>
    %18 = vector.shape_cast %17 : vector<1x8x1xf32> to vector<8x1xf32>
    %19 = vector.broadcast %18 : vector<8x1xf32> to vector<8x128xf32>
    %20 = arith.mulf %16, %19 : vector<8x128xf32>
    %c1_17 = arith.constant 1 : index
    %c128_18 = arith.constant 128 : index
    %21 = vector.load %arg7[%c1_17, %c128_18] : memref<16x256xf32, #tpu.memory_space<vmem>>, vector<8x128xf32>
    tpu.vector_store %arg7[%c1_17, %c128_18], %20 {strides = array<i32>} : memref<16x256xf32, #tpu.memory_space<vmem>>, vector<8x128xf32>,
    %c0_19 = arith.constant 0 : index
    %c0_20 = arith.constant 0 : index
    %22 = vector.load %arg7[%c0_19, %c0_20] : memref<16x256xf32, #tpu.memory_space<vmem>>, vector<8x128xf32>
    %c0_21 = arith.constant 0 : index
    %c0_22 = arith.constant 0 : index
    %23 = vector.load %arg3[%c0_21, %c0_22] : memref<5x128xf32, #tpu.memory_space<vmem>>, vector<1x128xf32>
    %24 = vector.broadcast %23 : vector<1x128xf32> to vector<8x128xf32>
    %25 = arith.mulf %22, %24 : vector<8x128xf32>
    %c0_23 = arith.constant 0 : index
    %c128_24 = arith.constant 128 : index
    %26 = vector.load %arg7[%c0_23, %c128_24] : memref<16x256xf32, #tpu.memory_space<vmem>>, vector<8x128xf32>
    %c1_25 = arith.constant 1 : index
    %c0_26 = arith.constant 0 : index
    %27 = vector.load %arg3[%c1_25, %c0_26] : memref<5x128xf32, #tpu.memory_space<vmem>>, vector<1x128xf32>
    %28 = vector.broadcast %27 : vector<1x128xf32> to vector<8x128xf32>
    %29 = arith.mulf %26, %28 : vector<8x128xf32>
    %30 = arith.addf %25, %29 : vector<8x128xf32>
    %c1_27 = arith.constant 1 : index
    %c0_28 = arith.constant 0 : index
    %31 = vector.load %arg7[%c1_27, %c0_28] : memref<16x256xf32, #tpu.memory_space<vmem>>, vector<8x128xf32>
    %c2_29 = arith.constant 2 : index
    %c0_30 = arith.constant 0 : index
    %32 = vector.load %arg3[%c2_29, %c0_30] : memref<5x128xf32, #tpu.memory_space<vmem>>, vector<1x128xf32>
    %33 = vector.broadcast %32 : vector<1x128xf32> to vector<8x128xf32>
    %34 = arith.mulf %31, %33 : vector<8x128xf32>
    %35 = arith.addf %30, %34 : vector<8x128xf32>
    %c1_31 = arith.constant 1 : index
    %c128_32 = arith.constant 128 : index
    %36 = vector.load %arg7[%c1_31, %c128_32] : memref<16x256xf32, #tpu.memory_space<vmem>>, vector<8x128xf32>
    %c3 = arith.constant 3 : index
    %c0_33 = arith.constant 0 : index
    %37 = vector.load %arg3[%c3, %c0_33] : memref<5x128xf32, #tpu.memory_space<vmem>>, vector<1x128xf32>
    %38 = vector.broadcast %37 : vector<1x128xf32> to vector<8x128xf32>
    %39 = arith.mulf %36, %38 : vector<8x128xf32>
    %40 = arith.addf %35, %39 : vector<8x128xf32>
    %c2_34 = arith.constant 2 : index
    %c0_35 = arith.constant 0 : index
    %41 = vector.load %arg7[%c2_34, %c0_35] : memref<16x256xf32, #tpu.memory_space<vmem>>, vector<8x128xf32>
    %c4 = arith.constant 4 : index
    %c0_36 = arith.constant 0 : index
    %42 = vector.load %arg3[%c4, %c0_36] : memref<5x128xf32, #tpu.memory_space<vmem>>, vector<1x128xf32>
    %43 = vector.broadcast %42 : vector<1x128xf32> to vector<8x128xf32>
    %44 = arith.mulf %41, %43 : vector<8x128xf32>
    %45 = arith.addf %40, %44 : vector<8x128xf32>
    %46 = arith.truncf %45 : vector<8x128xf32> to vector<8x128xbf16>
    %c0_37 = arith.constant 0 : index
    %c0_38 = arith.constant 0 : index
    %47 = vector.load %arg4[%c0_37, %c0_38] : memref<128x128xbf16, #tpu.memory_space<vmem>>, vector<128x128xbf16>
    %cst_39 = arith.constant dense<0.000000e+00> : vector<8x128xf32>
    %48 = tpu.matmul %46, %47, %cst_39 {dimension_numbers = #tpu.dot_dimension_numbers<[1], [0], [0], [1], [0, 0, 1, 1], [], []>} : vector<8x128xbf16>, vector<128x128xbf16>, vector<8x128xf32> -> vector<8x128xf32>
    %c0_40 = arith.constant 0 : index
    %c0_41 = arith.constant 0 : index
    %49 = vector.load %arg5[%c0_40, %c0_41] : memref<1x128xf32, #tpu.memory_space<vmem>>, vector<1x128xf32>
    %50 = vector.broadcast %49 : vector<1x128xf32> to vector<8x128xf32>
    %51 = arith.addf %48, %50 : vector<8x128xf32>
    %c0_42 = arith.constant 0 : index
    %c0_43 = arith.constant 0 : index
    %c0_44 = arith.constant 0 : index
    %52 = vector.load %arg6[%c0_42, %c0_43, %c0_44] : memref<1x8x128xf32, #tpu.memory_space<vmem>>, vector<1x8x128xf32>
    %53 = vector.shape_cast %52 : vector<1x8x128xf32> to vector<8x128xf32>
    %54 = vector.shape_cast %51 : vector<8x128xf32> to vector<1x8x128xf32>
    tpu.vector_store %arg6[%c0_42, %c0_43, %c0_44], %54 {strides = array<i32>} : memref<1x8x128xf32, #tpu.memory_space<vmem>>, vector<1x8x128xf32>,
    return
  }
  func.func @transform_0(%arg0: i32) -> (i32, i32, i32) {
    %c0_i32 = arith.constant 0 : i32
    %c0_i32_0 = arith.constant 0 : i32
    %c0_i32_1 = arith.constant 0 : i32
    return %arg0, %c0_i32, %c0_i32_0 : i32, i32, i32
  }
  func.func @transform_1(%arg0: i32) -> (i32, i32, i32) {
    %c0_i32 = arith.constant 0 : i32
    %c0_i32_0 = arith.constant 0 : i32
    %c0_i32_1 = arith.constant 0 : i32
    return %arg0, %c0_i32, %c0_i32_0 : i32, i32, i32
  }
  func.func @transform_2(%arg0: i32) -> (i32, i32) {
    %c0_i32 = arith.constant 0 : i32
    %c0_i32_0 = arith.constant 0 : i32
    %c0_i32_1 = arith.constant 0 : i32
    return %c0_i32, %c0_i32_0 : i32, i32
  }
  func.func @transform_3(%arg0: i32) -> (i32, i32) {
    %c0_i32 = arith.constant 0 : i32
    %c0_i32_0 = arith.constant 0 : i32
    %c0_i32_1 = arith.constant 0 : i32
    return %c0_i32, %c0_i32_0 : i32, i32
  }
  func.func @transform_4(%arg0: i32) -> (i32, i32) {
    %c0_i32 = arith.constant 0 : i32
    %c0_i32_0 = arith.constant 0 : i32
    %c0_i32_1 = arith.constant 0 : i32
    return %c0_i32, %c0_i32_0 : i32, i32
  }
  func.func @transform_5(%arg0: i32) -> (i32, i32, i32) {
    %c0_i32 = arith.constant 0 : i32
    %c0_i32_0 = arith.constant 0 : i32
    %c0_i32_1 = arith.constant 0 : i32
    return %arg0, %c0_i32, %c0_i32_0 : i32, i32, i32
  }
}

</mosaic_0001>

<llo_original>
// kernel: tpu_custom_call.1
$region0: #{tpu_custom_call.1}
  #allocation0 [shape = 'u32[]', space=smem, size = 0x4, offset = 0x4, fixed_abs, tag = 'smem constant byte address 0x4 - core index']
  #allocation1 [shape = 'u32[144,128]{1,0:T(1,128)}', space=vmem, size = 0x12000, scoped, tag = 'internal scratch']
  #allocation2 [shape = 'f32[16,256]{1,0:T(8,128)}', space=vmem, size = 0x4000, scoped, tag = 'scratch operand']
  %s0 = inlined_call_operand.hbm [shape: bf16[2,8,256], index: 0, kind: input, shape index: {}]
  %s1 = inlined_call_operand.hbm [shape: f32[2,8,2], index: 1, kind: input, shape index: {}]
  %s2 = inlined_call_operand.hbm [shape: f32[5,128], index: 2, kind: input, shape index: {}]
  %s3 = inlined_call_operand.hbm [shape: bf16[128,128], index: 3, kind: input, shape index: {}]
  %s4 = inlined_call_operand.hbm [shape: f32[1,128], index: 4, kind: input, shape index: {}]
  %s5 = inlined_call_operand.hbm [shape: f32[2,8,128], index: 5, kind: output, shape index: {}]
  %s6 = sld [smem:[#allocation0]]
  $region73: #{tpu_custom_call.1} parent=0
    _
  %s8 = ssub.s32 1, %s6
  %s9 = scalar_select 0, %s8, %s6
  $region1: #{tpu_custom_call.1} parent=0
    #allocation3 [shape = 'u8[8192]{0}', space=vmem, size = 0x2000, scoped, tag = 'input window, operand 0']
    #allocation4 [shape = 's32[2]{0}', space=sflag, size = 0x8, scoped, tag = 'scoped memory for tpu_custom_call.1']
    #allocation5 [shape = 's32[2]{0}', space=sflag, size = 0x8, scoped, tag = 'scoped memory for tpu_custom_call.1']
    #allocation6 [shape = 'u8[8192]{0}', space=vmem, size = 0x2000, scoped, tag = 'input window, operand 1']
    #allocation7 [shape = 's32[2]{0}', space=sflag, size = 0x8, scoped, tag = 'scoped memory for tpu_custom_call.1']
    #allocation8 [shape = 'u8[4096]{0}', space=vmem, size = 0x1000, scoped, tag = 'input window, operand 2, single buffered']
    #allocation9 [shape = 'u8[32768]{0}', space=vmem, size = 0x8000, scoped, tag = 'input window, operand 3, single buffered']
    #allocation10 [shape = 's32[1]{0}', space=sflag, size = 0x4, scoped, tag = 'scoped memory for tpu_custom_call.1']
    #allocation11 [shape = 'u8[512]{0}', space=vmem, size = 0x400, scoped, tag = 'input window, operand 4, single buffered']
    #allocation12 [shape = 'u8[8192]{0}', space=vmem, size = 0x2000, scoped, tag = 'output window, operand 0']
    %10 = vsyncpa [#allocation4], 0
    %s11 = scalar_lea.sflag [#allocation4], 1
    %12 = vsyncpa %s11, 0
    %13 = vsyncpa [#allocation7], 0
    %s14 = scalar_lea.sflag [#allocation7], 1
    %15 = vsyncpa %s14, 0
    %16 = vsyncpa [#allocation10], 0
    %17 = vsyncpa [#allocation5], 0
    %s18 = scalar_lea.sflag [#allocation5], 1
    %19 = vsyncpa %s18, 0
    loop: start=0, step=1, limit=4
    $region2: #{tpu_custom_call.1} parent=1 // loop_pre_header
      _
    $region3: #{tpu_custom_call.1} parent=1 // loop_header
      %s21 = sphi 0, %s25
      %p22 = scmp.ge.s32.totalorder %s21, 4
      %s31 = sphi 0, %s33
      %s34 = sphi 0, %s31
      %s35 = sphi 0, %s34
      %s51 = sphi 0, %s35
      %s57 = sphi 0, %s59
      %s60 = sphi 0, %s57
      %s61 = sphi 0, %s60
      %s77 = sphi 0, %s61
      %s81 = sphi 0, %s81
      %s83 = sphi 0, %s81
      %s84 = sphi 0, %s83
      %s98 = sphi 0, %s84
      %s102 = sphi 0, %s102
      %s104 = sphi 0, %s102
      %s105 = sphi 0, %s104
      %s119 = sphi 0, %s105
      %s123 = sphi 0, %s123
      %s125 = sphi 0, %s123
      %s126 = sphi 0, %s125
      %s140 = sphi 0, %s126
      %s146 = sphi 0, %s148
      %s149 = sphi 0, %s146
      %s150 = sphi 0, %s149
      %s166 = sphi 0, %s150
    $region4: #{tpu_custom_call.1} parent=1 // loop_header_branch
      %24 = sbr.rel (%p22) target = $region8
    $region5: #{tpu_custom_call.1} parent=1 // loop_body
      %s26 = ssub.s32 %s21, 1
      %s27 = ssub.s32 %s21, 2
      %s28 = sadd.s32 %s21, 1
      %s29 = ssub.s32 %s21, %s28
      %p30 = scmp.eq.s32.totalorder %s29, 0
      %s32 = sadd.s32 %s31, 1
      %s33 = scalar_select %p30, %s31, %s32
      %p36 = pneg %p30
      %p37 = scmp.eq.s32.totalorder %s21, 1
      %p38 = por %p36, %p37
      %p39 = scmp.ne.s32.totalorder %s31, %s34
      %p40 = scmp.eq.s32.totalorder %s21, 0
      %p41 = por %p39, %p40
      %p42 = scmp.ne.s32.totalorder %s31, %s34
      %p43 = scmp.eq.s32.totalorder %s26, 1
      %p44 = por %p42, %p43
      %p45 = scmp.ne.s32.totalorder %s34, %s35
      %p46 = scmp.eq.s32.totalorder %s26, 0
      %p47 = por %p45, %p46
      %p48 = scmp.ne.s32.totalorder %s34, %s35
      %p49 = scmp.eq.s32.totalorder %s27, 1
      %p50 = por %p48, %p49
      %p52 = scmp.ne.s32.totalorder %s35, %s51
      %p53 = scmp.eq.s32.totalorder %s27, 0
      %p54 = por %p52, %p53
      %s55 = ssub.s32 %s21, %s28
      %p56 = scmp.eq.s32.totalorder %s55, 0
      %s58 = sadd.s32 %s57, 1
      %s59 = scalar_select %p56, %s57, %s58
      %p62 = pneg %p56
      %p63 = scmp.eq.s32.totalorder %s21, 1
      %p64 = por %p62, %p63
      %p65 = scmp.ne.s32.totalorder %s57, %s60
      %p66 = scmp.eq.s32.totalorder %s21, 0
      %p67 = por %p65, %p66
      %p68 = scmp.ne.s32.totalorder %s57, %s60
      %p69 = scmp.eq.s32.totalorder %s26, 1
      %p70 = por %p68, %p69
      %p71 = scmp.ne.s32.totalorder %s60, %s61
      %p72 = scmp.eq.s32.totalorder %s26, 0
      %p73 = por %p71, %p72
      %p74 = scmp.ne.s32.totalorder %s60, %s61
      %p75 = scmp.eq.s32.totalorder %s27, 1
      %p76 = por %p74, %p75
      %p78 = scmp.ne.s32.totalorder %s61, %s77
      %p79 = scmp.eq.s32.totalorder %s27, 0
      %p80 = por %p78, %p79
      %s82 = sadd.s32 %s81, 1
      %p85 = scmp.eq.s32.totalorder %s21, 1
      %p86 = scmp.ne.s32.totalorder %s81, %s83
      %p87 = scmp.eq.s32.totalorder %s21, 0
      %p88 = por %p86, %p87
      %p89 = scmp.ne.s32.totalorder %s81, %s83
      %p90 = scmp.eq.s32.totalorder %s26, 1
      %p91 = por %p89, %p90
      %p92 = scmp.ne.s32.totalorder %s83, %s84
      %p93 = scmp.eq.s32.totalorder %s26, 0
      %p94 = por %p92, %p93
      %p95 = scmp.ne.s32.totalorder %s83, %s84
      %p96 = scmp.eq.s32.totalorder %s27, 1
      %p97 = por %p95, %p96
      %p99 = scmp.ne.s32.totalorder %s84, %s98
      %p100 = scmp.eq.s32.totalorder %s27, 0
      %p101 = por %p99, %p100
      %s103 = sadd.s32 %s102, 1
      %p106 = scmp.eq.s32.totalorder %s21, 1
      %p107 = scmp.ne.s32.totalorder %s102, %s104
      %p108 = scmp.eq.s32.totalorder %s21, 0
      %p109 = por %p107, %p108
      %p110 = scmp.ne.s32.totalorder %s102, %s104
      %p111 = scmp.eq.s32.totalorder %s26, 1
      %p112 = por %p110, %p111
      %p113 = scmp.ne.s32.totalorder %s104, %s105
      %p114 = scmp.eq.s32.totalorder %s26, 0
      %p115 = por %p113, %p114
      %p116 = scmp.ne.s32.totalorder %s104, %s105
      %p117 = scmp.eq.s32.totalorder %s27, 1
      %p118 = por %p116, %p117
      %p120 = scmp.ne.s32.totalorder %s105, %s119
      %p121 = scmp.eq.s32.totalorder %s27, 0
      %p122 = por %p120, %p121
      %s124 = sadd.s32 %s123, 1
      %p127 = scmp.eq.s32.totalorder %s21, 1
      %p128 = scmp.ne.s32.totalorder %s123, %s125
      %p129 = scmp.eq.s32.totalorder %s21, 0
      %p130 = por %p128, %p129
      %p131 = scmp.ne.s32.totalorder %s123, %s125
      %p132 = scmp.eq.s32.totalorder %s26, 1
      %p133 = por %p131, %p132
      %p134 = scmp.ne.s32.totalorder %s125, %s126
      %p135 = scmp.eq.s32.totalorder %s26, 0
      %p136 = por %p134, %p135
      %p137 = scmp.ne.s32.totalorder %s125, %s126
      %p138 = scmp.eq.s32.totalorder %s27, 1
      %p139 = por %p137, %p138
      %p141 = scmp.ne.s32.totalorder %s126, %s140
      %p142 = scmp.eq.s32.totalorder %s27, 0
      %p143 = por %p141, %p142
      %s144 = ssub.s32 %s21, %s28
      %p145 = scmp.eq.s32.totalorder %s144, 0
      %s147 = sadd.s32 %s146, 1
      %s148 = scalar_select %p145, %s146, %s147
      %p151 = pneg %p145
      %p152 = scmp.eq.s32.totalorder %s21, 1
      %p153 = por %p151, %p152
      %p154 = scmp.ne.s32.totalorder %s146, %s149
      %p155 = scmp.eq.s32.totalorder %s21, 0
      %p156 = por %p154, %p155
      %p157 = scmp.ne.s32.totalorder %s146, %s149
      %p158 = scmp.eq.s32.totalorder %s26, 1
      %p159 = por %p157, %p158
      %p160 = scmp.ne.s32.totalorder %s149, %s150
      %p161 = scmp.eq.s32.totalorder %s26, 0
      %p162 = por %p160, %p161
      %p163 = scmp.ne.s32.totalorder %s149, %s150
      %p164 = scmp.eq.s32.totalorder %s27, 1
      %p165 = por %p163, %p164
      %p167 = scmp.ne.s32.totalorder %s150, %s166
      %p168 = scmp.eq.s32.totalorder %s27, 0
      %p169 = por %p167, %p168
      %p170 = scmp.le.s32.totalorder 1, %s21
      %p171 = scmp.lt.s32.totalorder %s21, 3
      %p172 = pnand %p170, %p171
      %p173 = pneg %p172
      // Predicated region
      $region9: #{tpu_custom_call.1} parent=5 // pred_check
        _
      $region10: #{tpu_custom_call.1} parent=5 // pred_check_branch
        %175 = sbr.rel (%p172) target = $region12
      $region11: #{tpu_custom_call.1} parent=5 // pred_region
        %s176 = ssub.s32 %s21, 1
        // Predicated region
        $region13: #{tpu_custom_call.1} parent=11 // pred_check
          %p177 = pneg %p94
        $region14: #{tpu_custom_call.1} parent=11 // pred_check_branch
          %179 = sbr.rel (%p177) target = $region16
        $region15: #{tpu_custom_call.1} parent=11 // pred_region
          %s181 = ssub.s32 128, 128
          %182 = vsyncadd [#allocation7], %s181
          %s184 = sshll.u32 [#allocation8], 4
          %s185 = int_to_ptr.vmem [resolvable:$true] %s184
          %187 = dma.hbm_to_vmem [thread:$0]  %s2, 128, %s185, [#allocation7]
        $region16: #{tpu_custom_call.1} parent=11 // pred_fallthru
          _
        // Predicated region
        $region17: #{tpu_custom_call.1} parent=11 // pred_check
          %p188 = pneg %p115
        $region18: #{tpu_custom_call.1} parent=11 // pred_check_branch
          %190 = sbr.rel (%p188) target = $region20
        $region19: #{tpu_custom_call.1} parent=11 // pred_region
          %s192 = ssub.s32 1024, 1024
          %193 = vsyncadd [#allocation10], %s192
          %s194 = sshll.u32 [#allocation9], 4
          %s195 = int_to_ptr.vmem [resolvable:$true] %s194
          %200 = dma.hbm_to_vmem [thread:$0]  %s3, 1024, %s195, [#allocation10], 64, 64, 4
        $region20: #{tpu_custom_call.1} parent=11 // pred_fallthru
          _
        // Predicated region
        $region21: #{tpu_custom_call.1} parent=11 // pred_check
          %p201 = pneg %p136
        $region22: #{tpu_custom_call.1} parent=11 // pred_check_branch
          %203 = sbr.rel (%p201) target = $region24
        $region23: #{tpu_custom_call.1} parent=11 // pred_region
          %s205 = ssub.s32 16, 16
          %206 = vsyncadd [#allocation10], %s205
          %s208 = sshll.u32 [#allocation11], 4
          %s209 = int_to_ptr.vmem [resolvable:$true] %s208
          %211 = dma.hbm_to_vmem [thread:$0]  %s4, 16, %s209, [#allocation10]
        $region24: #{tpu_custom_call.1} parent=11 // pred_fallthru
          _
      $region12: #{tpu_custom_call.1} parent=5 // pred_fallthru
        _
      %p212 = scmp.lt.s32.totalorder %s21, 2
      // Predicated region
      $region25: #{tpu_custom_call.1} parent=5 // pred_check
        %p213 = pneg %p212
      $region26: #{tpu_custom_call.1} parent=5 // pred_check_branch
        %215 = sbr.rel (%p213) target = $region28
      $region27: #{tpu_custom_call.1} parent=5 // pred_region
        // Predicated region
        $region29: #{tpu_custom_call.1} parent=27 // pred_check
          %p216 = pneg %p41
        $region30: #{tpu_custom_call.1} parent=27 // pred_check_branch
          %218 = sbr.rel (%p216) target = $region32
        $region31: #{tpu_custom_call.1} parent=27 // pred_region
          %s219 = sand.u32 %s31, 1
          %s220 = scalar_lea.sflag [#allocation4], %s219
          %s221 = sand.u32 %s31, 1
          %s222 = smul.addr %s221, 8
          %s223 = scalar_lea.vmem [#allocation3], %s222
          %s225 = ssub.s32 128, 128
          %226 = vsyncadd %s220, %s225
          %s227 = smul.addr %s21, 2
          %s228 = smul.addr %s227, 64
          %s229 = scalar_lea.hbm %s0, %s228
          %s231 = sshll.u32 %s223, 4
          %s232 = int_to_ptr.vmem [resolvable:$true] %s231
          %234 = dma.hbm_to_vmem [thread:$0]  %s229, 128, %s232, %s220
        $region32: #{tpu_custom_call.1} parent=27 // pred_fallthru
          _
        // Predicated region
        $region33: #{tpu_custom_call.1} parent=27 // pred_check
          %p235 = pneg %p67
        $region34: #{tpu_custom_call.1} parent=27 // pred_check_branch
          %237 = sbr.rel (%p235) target = $region36
        $region35: #{tpu_custom_call.1} parent=27 // pred_region
          %s238 = sand.u32 %s21, 1
          %s239 = scalar_lea.sflag [#allocation7], %s238
          %s240 = sand.u32 %s57, 1
          %s241 = smul.addr %s240, 8
          %s242 = scalar_lea.vmem [#allocation6], %s241
          %s244 = ssub.s32 128, 128
          %245 = vsyncadd %s239, %s244
          %s246 = smul.addr %s21, 128
          %s247 = scalar_lea.hbm %s1, %s246
          %s249 = sshll.u32 %s242, 4
          %s250 = int_to_ptr.vmem [resolvable:$true] %s249
          %252 = dma.hbm_to_vmem [thread:$0]  %s247, 128, %s250, %s239
        $region36: #{tpu_custom_call.1} parent=27 // pred_fallthru
          _
      $region28: #{tpu_custom_call.1} parent=5 // pred_fallthru
        _
      %p253 = scmp.le.s32.totalorder 1, %s21
      %p254 = scmp.lt.s32.totalorder %s21, 3
      %p255 = pnand %p253, %p254
      %p256 = pneg %p255
      // Predicated region
      $region37: #{tpu_custom_call.1} parent=5 // pred_check
        _
      $region38: #{tpu_custom_call.1} parent=5 // pred_check_branch
        %258 = sbr.rel (%p255) target = $region40
      $region39: #{tpu_custom_call.1} parent=5 // pred_region
        %s259 = ssub.s32 %s21, 1
        %s260 = sand.u32 %s34, 1
        %s261 = scalar_lea.sflag [#allocation4], %s260
        %s262 = sand.u32 %s34, 1
        %s263 = smul.addr %s262, 8
        %s264 = scalar_lea.vmem [#allocation3], %s263
        // Predicated region
        $region41: #{tpu_custom_call.1} parent=39 // pred_check
          %p265 = pneg %p47
        $region42: #{tpu_custom_call.1} parent=39 // pred_check_branch
          %267 = sbr.rel (%p265) target = $region44
        $region43: #{tpu_custom_call.1} parent=39 // pred_region
          %268 = dma.done %s261, 128
        $region44: #{tpu_custom_call.1} parent=39 // pred_fallthru
          _
        %s269 = sand.u32 %s26, 1
        %s270 = scalar_lea.sflag [#allocation7], %s269
        %s271 = sand.u32 %s60, 1
        %s272 = smul.addr %s271, 8
        %s273 = scalar_lea.vmem [#allocation6], %s272
        // Predicated region
        $region45: #{tpu_custom_call.1} parent=39 // pred_check
          %p274 = pneg %p73
        $region46: #{tpu_custom_call.1} parent=39 // pred_check_branch
          %276 = sbr.rel (%p274) target = $region48
        $region47: #{tpu_custom_call.1} parent=39 // pred_region
          %277 = dma.done %s270, 128
        $region48: #{tpu_custom_call.1} parent=39 // pred_fallthru
          _
        // Predicated region
        $region49: #{tpu_custom_call.1} parent=39 // pred_check
          %p278 = pneg %p94
        $region50: #{tpu_custom_call.1} parent=39 // pred_check_branch
          %280 = sbr.rel (%p278) target = $region52
        $region51: #{tpu_custom_call.1} parent=39 // pred_region
          %281 = dma.done [#allocation7], 128
        $region52: #{tpu_custom_call.1} parent=39 // pred_fallthru
          _
        // Predicated region
        $region53: #{tpu_custom_call.1} parent=39 // pred_check
          %p282 = pneg %p115
        $region54: #{tpu_custom_call.1} parent=39 // pred_check_branch
          %284 = sbr.rel (%p282) target = $region56
        $region55: #{tpu_custom_call.1} parent=39 // pred_region
          %285 = dma.done [#allocation10], 1024
        $region56: #{tpu_custom_call.1} parent=39 // pred_fallthru
          _
        // Predicated region
        $region57: #{tpu_custom_call.1} parent=39 // pred_check
          %p286 = pneg %p136
        $region58: #{tpu_custom_call.1} parent=39 // pred_check_branch
          %288 = sbr.rel (%p286) target = $region60
        $region59: #{tpu_custom_call.1} parent=39 // pred_region
          %289 = dma.done [#allocation10], 16
        $region60: #{tpu_custom_call.1} parent=39 // pred_fallthru
          _
        %s290 = sand.u32 %s34, 1
        %s291 = scalar_lea.sflag [#allocation4], %s290
        %s292 = sand.u32 %s34, 1
        %s293 = smul.addr %s292, 8
        %s294 = scalar_lea.vmem [#allocation3], %s293
        %p295 = pneg %p47
        %p296 = pneg %p44
        %s297 = sand.u32 %s26, 1
        %s298 = scalar_lea.sflag [#allocation7], %s297
        %s299 = sand.u32 %s60, 1
        %s300 = smul.addr %s299, 8
        %s301 = scalar_lea.vmem [#allocation6], %s300
        %p302 = pneg %p73
        %p303 = pneg %p70
        %p304 = pneg %p94
        %p305 = pneg %p91
        %p306 = pneg %p115
        %p307 = pneg %p112
        %p308 = pneg %p136
        %p309 = pneg %p133
        %p310 = pneg %p162
        %p311 = pneg %p159
        %s312 = sand.u32 %s149, 1
        %s313 = scalar_lea.sflag [#allocation5], %s312
        %s314 = sand.u32 %s149, 1
        %s315 = smul.addr %s314, 8
        %s316 = scalar_lea.vmem [#allocation12], %s315
        %318 = vst [vmem:[#allocation2] sm:$0x3] 0.0
        %v319 = vld [vmem:[%s264 + $0x4] sm:$0xf]
        %v320 = vunpack.c.l.bf16 %v319
        %v321 = vld [vmem:[%s273] sm:$0xff]
        %323 = vset.pattern.permute.xlu0 1
        %324 = vperm.xlu0 %323, %v321
        %v325 = vpop.permute.xlu0 %324
        %v327 = vmul.f32 %v320, %v325
        %v329 = vrot.slane %v327, 6
        %331 = vst [vmem:[#allocation2] sm:$0xfc] %v329
        %332 = vst [vmem:[#allocation2 + $0x10] sm:$0x3] %v329
        %333 = vst [vmem:[#allocation2 + $0x8] sm:$0x1] 0.0
        %334 = vst [vmem:[#allocation2 + $0x19] sm:$0x1] 0.0
        %v335 = vld [vmem:[%s264] sm:$0xf]
        %v336 = vunpack.c.l.bf16 %v335
        %v337 = vld [vmem:[%s273] sm:$0xff]
        %339 = vset.pattern.permute.xlu0 0
        %340 = vperm.xlu0 %339, %v337
        %v341 = vpop.permute.xlu0 %340
        %v343 = vmul.f32 %v336, %v341
        %v345 = vrot.slane %v343, 7
        %347 = vst [vmem:[#allocation2 + $0x8] sm:$0xfe] %v345
        %348 = vst [vmem:[#allocation2 + $0x18] sm:$0x1] %v345
        %v349 = vld [vmem:[#allocation2] sm:$0xff]
        %v350 = vld [vmem:[#allocation8] sm:$0x1]
        %v351 = vlaneseq
        %v352 = vshrl.u32 %v351, 7
        %v353 = vsub.s32 0, %v352
        %v354 = vrot.slane %v350, %v353
        %v355 = vmul.f32 %v349, %v354
        %v356 = vld [vmem:[#allocation2 + $0x8] sm:$0xff]
        %v357 = vld [vmem:[#allocation8 + $0x1] sm:$0x1]
        %v358 = vlaneseq
        %v359 = vshrl.u32 %v358, 7
        %v360 = vsub.s32 0, %v359
        %v361 = vrot.slane %v357, %v360
        %v362 = vmul.f32 %v356, %v361
        %v363 = vadd.f32 %v355, %v362
        %v364 = vld [vmem:[#allocation2] sm:$0xfe]
        %v365 = vld [vmem:[#allocation2 + $0x10] sm:$0x1]
        %v366 = vld [vmem:[#allocation8 + $0x2] sm:$0x1]
        %v367 = vlaneseq
        %v368 = vshrl.u32 %v367, 7
        %v369 = vsub.s32 0, %v368
        %v370 = vrot.slane %v366, %v369
        %v371 = vmul.f32 %v364, %v370
        %v372 = vmul.f32 %v365, %v370
        %vm375 = vcmask 1046528
        %v376 = vrot.slane %v371, 1
        %v377 = vrot.slane %v372, 1
        %v378 = vsel %vm375, %v376, %v377
        %v380 = vadd.f32 %v363, %v378
        %v381 = vld [vmem:[#allocation2 + $0x8] sm:$0xfe]
        %v382 = vld [vmem:[#allocation2 + $0x18] sm:$0x1]
        %v383 = vld [vmem:[#allocation8 + $0x3] sm:$0x1]
        %v384 = vlaneseq
        %v385 = vshrl.u32 %v384, 7
        %v386 = vsub.s32 0, %v385
        %v387 = vrot.slane %v383, %v386
        %v388 = vmul.f32 %v381, %v387
        %v389 = vmul.f32 %v382, %v387
        %v392 = vrot.slane %v388, 1
        %v393 = vrot.slane %v389, 1
        %v394 = vsel %vm375, %v392, %v393
        %v396 = vadd.f32 %v380, %v394
        %v397 = vld [vmem:[#allocation2] sm:$0xfc]
        %v398 = vld [vmem:[#allocation2 + $0x10] sm:$0x3]
        %v399 = vld [vmem:[#allocation8 + $0x4] sm:$0x1]
        %v400 = vlaneseq
        %v401 = vshrl.u32 %v400, 7
        %v402 = vsub.s32 0, %v401
        %v403 = vrot.slane %v399, %v402
        %v404 = vmul.f32 %v397, %v403
        %v405 = vmul.f32 %v398, %v403
        %vm408 = vcmask 1045504
        %v409 = vrot.slane %v404, 2
        %v410 = vrot.slane %v405, 2
        %v411 = vsel %vm408, %v409, %v410
        %v413 = vadd.f32 %v396, %v411
        %v414 = vpack.c.bf16 %v413, %v413
        %v415 = vld [vmem:[#allocation9] sm:$0xf]
        %v416 = vld [vmem:[#allocation9 + $0x4] sm:$0xf]
        %v417 = vld [vmem:[#allocation9 + $0x8] sm:$0xf]
        %v418 = vld [vmem:[#allocation9 + $0xc] sm:$0xf]
        %v419 = vld [vmem:[#allocation9 + $0x10] sm:$0xf]
        %v420 = vld [vmem:[#allocation9 + $0x14] sm:$0xf]
        %v421 = vld [vmem:[#allocation9 + $0x18] sm:$0xf]
        %v422 = vld [vmem:[#allocation9 + $0x1c] sm:$0xf]
        %v423 = vld [vmem:[#allocation9 + $0x20] sm:$0xf]
        %v424 = vld [vmem:[#allocation9 + $0x24] sm:$0xf]
        %v425 = vld [vmem:[#allocation9 + $0x28] sm:$0xf]
        %v426 = vld [vmem:[#allocation9 + $0x2c] sm:$0xf]
        %v427 = vld [vmem:[#allocation9 + $0x30] sm:$0xf]
        %v428 = vld [vmem:[#allocation9 + $0x34] sm:$0xf]
        %v429 = vld [vmem:[#allocation9 + $0x38] sm:$0xf]
        %v430 = vld [vmem:[#allocation9 + $0x3c] sm:$0xf]
        %v431 = vld [vmem:[#allocation11] sm:$0x1]
        %v433 = vlaneseq
        %v434 = vshrl.u32 %v433, 7
        %v435 = vsub.s32 0, %v434
        %v436 = vrot.slane %v431, %v435
        %v454 = vunpack.c.l.b16 %v415
        %v455 = vunpack.c.l.b16 %v416
        %v456 = vunpack.c.l.b16 %v417
        %v457 = vunpack.c.l.b16 %v418
        %v458 = vunpack.c.l.b16 %v419
        %v459 = vunpack.c.l.b16 %v420
        %v460 = vunpack.c.l.b16 %v421
        %v461 = vunpack.c.l.b16 %v422
        %v462 = vunpack.c.l.b16 %v423
        %v463 = vunpack.c.l.b16 %v424
        %v464 = vunpack.c.l.b16 %v425
        %v465 = vunpack.c.l.b16 %v426
        %v466 = vunpack.c.l.b16 %v427
        %v467 = vunpack.c.l.b16 %v428
        %v468 = vunpack.c.l.b16 %v429
        %v469 = vunpack.c.l.b16 %v430
        %v470 = vpack.c.b16 %v455, %v454
        %v471 = vpack.c.b16 %v457, %v456
        %v472 = vpack.c.b16 %v459, %v458
        %v473 = vpack.c.b16 %v461, %v460
        %v474 = vpack.c.b16 %v463, %v462
        %v475 = vpack.c.b16 %v465, %v464
        %v476 = vpack.c.b16 %v467, %v466
        %v477 = vpack.c.b16 %v469, %v468
        %486 = vmatprep.subr.bf16.mxu0 0
        %487 = vmatpush1.bf16.msra.mxu0 %v470
        %488 = vmatprep.subr.bf16.mxu0 0
        %489 = vmatpush1.bf16.msra.mxu0 %v471
        %490 = vmatprep.subr.bf16.mxu0 0
        %491 = vmatpush1.bf16.msra.mxu0 %v472
        %492 = vmatprep.subr.bf16.mxu0 0
        %493 = vmatpush1.bf16.msra.mxu0 %v473
        %494 = vmatprep.subr.bf16.mxu0 0
        %495 = vmatpush1.bf16.msra.mxu0 %v474
        %496 = vmatprep.subr.bf16.mxu0 0
        %497 = vmatpush1.bf16.msra.mxu0 %v475
        %498 = vmatprep.subr.bf16.mxu0 0
        %499 = vmatpush1.bf16.msra.mxu0 %v476
        %500 = vmatprep.subr.bf16.mxu0 0
        %501 = vmatpush1.bf16.msra.mxu0 %v477
        %502 = vmatprep.subr.bf16.mxu0 0
        %503 = vmatpush1.bf16.msra.mxu0 0
        %504 = vmatprep.subr.bf16.mxu0 0
        %505 = vmatpush1.bf16.msra.mxu0 0
        %506 = vmatprep.subr.bf16.mxu0 0
        %507 = vmatpush1.bf16.msra.mxu0 0
        %508 = vmatprep.subr.bf16.mxu0 0
        %509 = vmatpush1.bf16.msra.mxu0 0
        %510 = vmatprep.subr.bf16.mxu0 0
        %511 = vmatpush1.bf16.msra.mxu0 0
        %512 = vmatprep.subr.bf16.mxu0 0
        %513 = vmatpush1.bf16.msra.mxu0 0
        %514 = vmatprep.subr.bf16.mxu0 0
        %515 = vmatpush1.bf16.msra.mxu0 0
        %516 = vmatprep.subr.bf16.mxu0 0
        %517 = vmatpush1.bf16.msra.mxu0 0
        %518 = vmatprep.mubr.bf16.mxu0 0
        %519 = vmatmul.mubr.bf16.gmra.mrb[0].mxu0 %v414
        %v520 = vpop.f32.mrb[0].mxu0
        %v521 = vadd.f32 %v436, %v520
        %v522 = vpop.f32.mrb[0].mxu0
        %v523 = vpop.f32.mrb[0].mxu0
        %v524 = vpop.f32.mrb[0].mxu0
        %525 = vdwg.mxu0
        %526 = vst [vmem:[%s316] sm:$0xff] %v521
        %s527 = sand.u32 %s149, 1
        %s528 = scalar_lea.sflag [#allocation5], %s527
        %s529 = sand.u32 %s149, 1
        %s530 = smul.addr %s529, 8
        %s531 = scalar_lea.vmem [#allocation12], %s530
        // Predicated region
        $region61: #{tpu_custom_call.1} parent=39 // pred_check
          %p532 = pneg %p159
        $region62: #{tpu_custom_call.1} parent=39 // pred_check_branch
          %534 = sbr.rel (%p532) target = $region64
        $region63: #{tpu_custom_call.1} parent=39 // pred_region
          %s536 = ssub.s32 128, 128
          %537 = vsyncadd %s528, %s536
          %s538 = smul.addr %s26, 128
          %s539 = scalar_lea.hbm %s5, %s538
          %s541 = sshll.u32 %s531, 4
          %s542 = int_to_ptr.vmem [resolvable:$true] %s541
          %544 = dma.vmem_to_hbm [thread:$0]  %s542, 128, %s539, %s528
        $region64: #{tpu_custom_call.1} parent=39 // pred_fallthru
          _
      $region40: #{tpu_custom_call.1} parent=5 // pred_fallthru
        _
      %p545 = scmp.le.s32.totalorder 2, %s21
      // Predicated region
      $region65: #{tpu_custom_call.1} parent=5 // pred_check
        %p546 = pneg %p545
      $region66: #{tpu_custom_call.1} parent=5 // pred_check_branch
        %548 = sbr.rel (%p546) target = $region68
      $region67: #{tpu_custom_call.1} parent=5 // pred_region
        %s549 = ssub.s32 %s21, 2
        // Predicated region
        $region69: #{tpu_custom_call.1} parent=67 // pred_check
          %p550 = pneg %p165
        $region70: #{tpu_custom_call.1} parent=67 // pred_check_branch
          %552 = sbr.rel (%p550) target = $region72
        $region71: #{tpu_custom_call.1} parent=67 // pred_region
          %s553 = sand.u32 %s150, 1
          %s554 = scalar_lea.sflag [#allocation5], %s553
          %s555 = sand.u32 %s150, 1
          %s556 = smul.addr %s555, 8
          %s557 = scalar_lea.vmem [#allocation12], %s556
          %558 = dma.done %s554, 128
        $region72: #{tpu_custom_call.1} parent=67 // pred_fallthru
          _
      $region68: #{tpu_custom_call.1} parent=5 // pred_fallthru
        _
    $region6: #{tpu_custom_call.1} parent=1 // loop_footer
      %s25 = sadd.s32 1, %s21
    $region7: #{tpu_custom_call.1} parent=1 // loop_footer_branch
      %20 = sbr.rel target = $region3
    $region8: #{tpu_custom_call.1} parent=1 // loop_exit
      _
    %559 = vsyncpa [#allocation4], 1
    %s560 = scalar_lea.sflag [#allocation4], 1
    %561 = vsyncpa %s560, 1
    %562 = vsyncpa [#allocation7], 1
    %s563 = scalar_lea.sflag [#allocation7], 1
    %564 = vsyncpa %s563, 1
    %565 = vsyncpa [#allocation10], 1
    %566 = vsyncpa [#allocation5], 1
    %s567 = scalar_lea.sflag [#allocation5], 1
    %568 = vsyncpa %s567, 1

</llo_original>
